<compile_context>
chip_gen: v5e
topology: v5e:2x2
jax: 0.10.0
libtpu: 0.0.40
codegen_flags: <defaults>
</compile_context>

<pallas_src>
import functools

import jax
import jax.numpy as jnp
from jax.experimental import pallas as pl
from jax.experimental.pallas import tpu as pltpu

_RGB_WEIGHTS = (0.2989, 0.587, 0.114)  # torchvision rgb_to_grayscale weights
_VMEM_LIMIT_BYTES = 32 << 20


# --------------------------------------------------------------------------- #
# Kernels
# --------------------------------------------------------------------------- #
def _single_pass_kernel(level_ref, x_ref, o_ref, *, inv_hw, channels):
    """x_ref/o_ref: (B, C, HW) VMEM tile; level_ref: (1,) f32 SMEM scalar."""
    level = level_ref[0]
    x = x_ref[...]                                                   # native dtype
    # Per-channel sums (f32 accumulation), then the weighted per-image mean.
    sums = jnp.sum(x, axis=2, dtype=jnp.float32, keepdims=True)      # (B, C, 1)
    if channels == 3:
        mean = (_RGB_WEIGHTS[0] * sums[:, 0:1]
                + _RGB_WEIGHTS[1] * sums[:, 1:2]
                + _RGB_WEIGHTS[2] * sums[:, 2:3]) * inv_hw           # (B, 1, 1)
    else:  # channels == 1
        mean = sums[:, 0:1] * inv_hw                                 # (B, 1, 1)
    out = level * x + (1.0 - level) * mean                           # f32 math
    o_ref[...] = jnp.clip(out, 0.0, 1.0).astype(o_ref.dtype)


def _mean_kernel(x_ref, mean_ref, *, inv_hw, channels):
    """Pass 1 of the two-pass path: accumulate per-image weighted mean.

    x_ref: (1, C, T) tile of the flattened image; mean_ref: (1, 8, 128) f32
    accumulator (output block resident across the HW grid axis).
    """
    @pl.when(pl.program_id(1) == 0)
    def _():
        mean_ref[...] = jnp.zeros_like(mean_ref)

    sums = jnp.sum(x_ref[...], axis=2, dtype=jnp.float32, keepdims=True)  # (1, C, 1)
    if channels == 3:
        s = (_RGB_WEIGHTS[0] * sums[:, 0:1]
             + _RGB_WEIGHTS[1] * sums[:, 1:2]
             + _RGB_WEIGHTS[2] * sums[:, 2:3])                            # (1, 1, 1)
    else:
        s = sums[:, 0:1]                                                  # (1, 1, 1)
    mean_ref[...] += s * inv_hw                                           # broadcast


def _blend_kernel(level_ref, mean_ref, x_ref, o_ref):
    """Pass 2 of the two-pass path: out = clamp(level*x + (1-level)*mean, 0, 1)."""
    level = level_ref[0]
    m = mean_ref[:, 0:1, 0:1]                                             # (1, 1, 1) f32
    out = level * x_ref[...] + (1.0 - level) * m
    o_ref[...] = jnp.clip(out, 0.0, 1.0).astype(o_ref.dtype)


# --------------------------------------------------------------------------- #
# Tiling helpers
# --------------------------------------------------------------------------- #
def _pick_batch_tile(n, img_bytes, target_bytes):
    """Largest divisor of n whose block stays <= target_bytes; keep grid >= 2 if possible."""
    cap = max(1, target_bytes // max(img_bytes, 1))
    if n >= 2:
        cap = min(cap, max(1, n // 2))   # grid length >= 2 keeps both v7x TCs busy
    best = 1
    for d in range(1, n + 1):
        if n % d == 0 and d <= cap:
            best = d
    return best


def _pick_hw_tile(hw, c, itemsize, target_bytes):
    """Largest multiple of 128 that divides hw with c*T*itemsize <= target_bytes."""
    max_elems = max(128, target_bytes // max(c * itemsize, 1))
    best = None
    k = 1
    while 128 * k <= min(hw, max_elems):
        t = 128 * k
        if hw % t == 0:
            best = t
        k += 1
    return best


# --------------------------------------------------------------------------- #
# Public entry point
# --------------------------------------------------------------------------- #
def adjust_contrast(img: jax.Array, level, *,
                    target_block_bytes: int = 1 << 20,
                    single_pass_max_img_bytes: int = 4 << 20) -> jax.Array:
    """Pallas equivalent of Contrast().forward(img, level) for float NCHW tensors."""
    # Match the module's guard, but only for concrete Python numbers (traced
    # scalars cannot be compared eagerly).
    if isinstance(level, (int, float)) and level < 0:
        raise ValueError("Level must be greater than 0.")

    n, c, h, w = img.shape
    if c not in (1, 3):
        raise ValueError(f"adjust_contrast supports 1 or 3 channels, got {c}.")
    # TODO(synk): integer image dtypes (clamp bound 255 + round-to-nearest) are not
    # handled; this kernel targets float images normalized to [0, 1].

    hw = h * w
    itemsize = jnp.dtype(img.dtype).itemsize
    img_bytes = c * hw * itemsize
    inv_hw = 1.0 / float(hw)

    level_arr = jnp.asarray([level], dtype=jnp.float32)
    x3 = img.reshape(n, c, hw)           # lane-dense: H*W on the 128-wide lane axis

    # ---------------- single-pass path: whole (batched) images per step --------
    if img_bytes <= single_pass_max_img_bytes:
        b_tile = _pick_batch_tile(n, img_bytes, target_block_bytes)
        kernel = functools.partial(_single_pass_kernel, inv_hw=inv_hw, channels=c)
        out3 = pl.pallas_call(
            kernel,
            out_shape=jax.ShapeDtypeStruct((n, c, hw), img.dtype),
            grid=(n // b_tile,),
            in_specs=[
                pl.BlockSpec(memory_space=pltpu.SMEM),                    # level scalar
                pl.BlockSpec((b_tile, c, hw), lambda i: (i, 0, 0)),       # images
            ],
            out_specs=pl.BlockSpec((b_tile, c, hw), lambda i: (i, 0, 0)),
            compiler_params=pltpu.CompilerParams(
                dimension_semantics=("parallel",),
                vmem_limit_bytes=_VMEM_LIMIT_BYTES),
            cost_estimate=pl.CostEstimate(
                flops=5 * n * c * hw,
                transcendentals=0,
                bytes_accessed=2 * n * c * hw * itemsize),
        )(level_arr, x3)
        return out3.reshape(n, c, h, w)

    # ---------------- two-pass path: tiled-HW reduction, then tiled blend ------
    t = _pick_hw_tile(hw, c, itemsize, target_block_bytes)
    if t is None:
        # TODO(synk): H*W has no 128-multiple divisor; fall back to whole-image tiles.
        t = hw
    n_hw = hw // t

    mean_kernel = functools.partial(_mean_kernel, inv_hw=inv_hw, channels=c)
    means = pl.pallas_call(
        mean_kernel,
        out_shape=jax.ShapeDtypeStruct((n, 8, 128), jnp.float32),
        grid=(n, n_hw),
        in_specs=[pl.BlockSpec((1, c, t), lambda i, j: (i, 0, j))],
        out_specs=pl.BlockSpec((1, 8, 128), lambda i, j: (i, 0, 0)),      # accumulator
        compiler_params=pltpu.CompilerParams(
            dimension_semantics=("parallel", "arbitrary"),
            vmem_limit_bytes=_VMEM_LIMIT_BYTES),
        cost_estimate=pl.CostEstimate(
            flops=2 * n * c * hw,
            transcendentals=0,
            bytes_accessed=n * c * hw * itemsize),
    )(x3)

    out3 = pl.pallas_call(
        _blend_kernel,
        out_shape=jax.ShapeDtypeStruct((n, c, hw), img.dtype),
        grid=(n, n_hw),
        in_specs=[
            pl.BlockSpec(memory_space=pltpu.SMEM),                        # level scalar
            pl.BlockSpec((1, 8, 128), lambda i, j: (i, 0, 0)),            # per-image mean
            pl.BlockSpec((1, c, t), lambda i, j: (i, 0, j)),              # image tile
        ],
        out_specs=pl.BlockSpec((1, c, t), lambda i, j: (i, 0, j)),
        compiler_params=pltpu.CompilerParams(
            dimension_semantics=("parallel", "parallel"),
            vmem_limit_bytes=_VMEM_LIMIT_BYTES),
        cost_estimate=pl.CostEstimate(
            flops=3 * n * c * hw,
            transcendentals=0,
            bytes_accessed=2 * n * c * hw * itemsize),
    )(level_arr, means, x3)
    return out3.reshape(n, c, h, w)


class Contrast:
    """Thin stand-in for the PyTorch module's forward()."""
    pixmix_max_level = 1.8
    level_type = float
    corruption_overlap = True

    def __call__(self, img, level):
        return adjust_contrast(img, level)


# --------------------------------------------------------------------------- #
# Reference + self-test
# --------------------------------------------------------------------------- #
def _reference(img, level):
    x = img.astype(jnp.float32)
    if img.shape[1] == 3:
        gray = (_RGB_WEIGHTS[0] * x[:, 0] + _RGB_WEIGHTS[1] * x[:, 1]
                + _RGB_WEIGHTS[2] * x[:, 2])
    else:
        gray = x[:, 0]
    mean = jnp.mean(gray, axis=(-2, -1), keepdims=True)[:, None]     # (N,1,1,1)
    return jnp.clip(level * x + (1.0 - level) * mean, 0.0, 1.0).astype(img.dtype)


if __name__ == "__main__":
    level = 1.3

    # Small RGB batch (N=2, C=3, H=W=16): exercises the single-pass path.
    img = jax.random.uniform(jax.random.PRNGKey(0), (2, 3, 16, 16), dtype=jnp.float32)
    out = jax.block_until_ready(adjust_contrast(img, level))
    ref = _reference(img, level)
    assert out.shape == img.shape and out.dtype == img.dtype
    assert jnp.allclose(out, ref, atol=1e-5, rtol=1e-5)

    # Force the two-pass (tiled-HW) path on a slightly larger image to exercise it.
    img2 = jax.random.uniform(jax.random.PRNGKey(0), (2, 3, 32, 128), dtype=jnp.float32)
    out2 = jax.block_until_ready(
        adjust_contrast(img2, level,
                        single_pass_max_img_bytes=1, target_block_bytes=2048))
    ref2 = _reference(img2, level)
    assert out2.shape == img2.shape and out2.dtype == img2.dtype
    assert jnp.allclose(out2, ref2, atol=1e-5, rtol=1e-5)

    print("KERNEL_OK")
</pallas_src>

<mosaic_0001>
module attributes {stable_mosaic.version = 11 : i64} {
  func.func @_single_pass_kernel(%arg0: i32, %arg1: memref<1xf32, #tpu.memory_space<smem>>, %arg2: memref<1x3x256xf32, #tpu.memory_space<vmem>>, %arg3: memref<1x3x256xf32, #tpu.memory_space<vmem>>) attributes {dimension_semantics = [#tpu.dimension_semantics<parallel>], iteration_bounds = array<i64: 2>, scalar_prefetch = 0 : i64, scratch_operands = 0 : i64, tpu.core_type = #tpu.core_type<tc>, window_params = [{transform_indices = @transform_0, window_bounds = array<i64: 1>}, {transform_indices = @transform_1, window_bounds = array<i64: 1, 3, 256>}, {transform_indices = @transform_2, window_bounds = array<i64: 1, 3, 256>}]} {
    %c0 = arith.constant 0 : index
    %0 = memref.load %arg1[%c0] : memref<1xf32, #tpu.memory_space<smem>>
    %c0_0 = arith.constant 0 : index
    %c0_1 = arith.constant 0 : index
    %c0_2 = arith.constant 0 : index
    %1 = vector.load %arg2[%c0_0, %c0_1, %c0_2] : memref<1x3x256xf32, #tpu.memory_space<vmem>>, vector<1x3x256xf32>
    %cst = arith.constant dense<0.000000e+00> : vector<1x3xf32>
    %2 = vector.multi_reduction <add>, %1, %cst [2] : vector<1x3x256xf32> to vector<1x3xf32>
    %3 = vector.shape_cast %2 : vector<1x3xf32> to vector<1x3x1xf32>
    %4 = vector.extract_strided_slice %3 {offsets = [0, 0, 0], sizes = [1, 1, 1], strides = [1, 1, 1]} : vector<1x3x1xf32> to vector<1x1x1xf32>
    %cst_3 = arith.constant 2.989000e-01 : f32
    %5 = vector.broadcast %cst_3 : f32 to vector<1x1x1xf32>
    %6 = arith.mulf %5, %4 : vector<1x1x1xf32>
    %7 = vector.extract_strided_slice %3 {offsets = [0, 1, 0], sizes = [1, 1, 1], strides = [1, 1, 1]} : vector<1x3x1xf32> to vector<1x1x1xf32>
    %cst_4 = arith.constant 5.870000e-01 : f32
    %8 = vector.broadcast %cst_4 : f32 to vector<1x1x1xf32>
    %9 = arith.mulf %8, %7 : vector<1x1x1xf32>
    %10 = arith.addf %6, %9 : vector<1x1x1xf32>
    %11 = vector.extract_strided_slice %3 {offsets = [0, 2, 0], sizes = [1, 1, 1], strides = [1, 1, 1]} : vector<1x3x1xf32> to vector<1x1x1xf32>
    %cst_5 = arith.constant 1.140000e-01 : f32
    %12 = vector.broadcast %cst_5 : f32 to vector<1x1x1xf32>
    %13 = arith.mulf %12, %11 : vector<1x1x1xf32>
    %14 = arith.addf %10, %13 : vector<1x1x1xf32>
    %cst_6 = arith.constant 3.906250e-03 : f32
    %15 = vector.broadcast %cst_6 : f32 to vector<1x1x1xf32>
    %16 = arith.mulf %14, %15 : vector<1x1x1xf32>
    %17 = vector.broadcast %0 : f32 to vector<1x3x256xf32>
    %18 = arith.mulf %17, %1 : vector<1x3x256xf32>
    %cst_7 = arith.constant 1.000000e+00 : f32
    %19 = arith.subf %cst_7, %0 : f32
    %20 = vector.broadcast %19 : f32 to vector<1x1x1xf32>
    %21 = arith.mulf %20, %16 : vector<1x1x1xf32>
    %22 = vector.broadcast %21 : vector<1x1x1xf32> to vector<1x3x256xf32>
    %23 = arith.addf %18, %22 : vector<1x3x256xf32>
    %cst_8 = arith.constant 0.000000e+00 : f32
    %cst_9 = arith.constant 1.000000e+00 : f32
    %24 = vector.broadcast %cst_8 : f32 to vector<1x3x256xf32>
    %25 = arith.maximumf %24, %23 : vector<1x3x256xf32>
    %26 = vector.broadcast %cst_9 : f32 to vector<1x3x256xf32>
    %27 = arith.minimumf %26, %25 : vector<1x3x256xf32>
    %c0_10 = arith.constant 0 : index
    %c0_11 = arith.constant 0 : index
    %c0_12 = arith.constant 0 : index
    %28 = vector.load %arg3[%c0_10, %c0_11, %c0_12] : memref<1x3x256xf32, #tpu.memory_space<vmem>>, vector<1x3x256xf32>
    tpu.vector_store %arg3[%c0_10, %c0_11, %c0_12], %27 {strides = array<i32>} : memref<1x3x256xf32, #tpu.memory_space<vmem>>, vector<1x3x256xf32>,
    return
  }
  func.func @transform_0(%arg0: i32) -> i32 {
    %c0_i32 = arith.constant 0 : i32
    %c0_i32_0 = arith.constant 0 : i32
    return %c0_i32 : i32
  }
  func.func @transform_1(%arg0: i32) -> (i32, i32, i32) {
    %c0_i32 = arith.constant 0 : i32
    %c0_i32_0 = arith.constant 0 : i32
    %c0_i32_1 = arith.constant 0 : i32
    return %arg0, %c0_i32, %c0_i32_0 : i32, i32, i32
  }
  func.func @transform_2(%arg0: i32) -> (i32, i32, i32) {
    %c0_i32 = arith.constant 0 : i32
    %c0_i32_0 = arith.constant 0 : i32
    %c0_i32_1 = arith.constant 0 : i32
    return %arg0, %c0_i32, %c0_i32_0 : i32, i32, i32
  }
}

</mosaic_0001>

<llo_original>
// kernel: tpu_custom_call.1
$region0: #{tpu_custom_call.1}
  #allocation0 [shape = 'u32[]', space=smem, size = 0x4, offset = 0x4, fixed_abs, tag = 'smem constant byte address 0x4 - core index']
  #allocation1 [shape = 'u32[72,128]{1,0:T(1,128)}', space=vmem, size = 0x9000, scoped, tag = 'internal scratch']
  #allocation2 [shape = 'f32[1]{0:T(128)S(6)}', space=smem, size = 0x200, scoped, tag = 'scoped memory for tpu_custom_call.1']
  %s0 = inlined_call_operand.<no memory space> [shape: f32[1], index: 0, kind: input, shape index: {}]
  %s1 = inlined_call_operand.vmem [shape: f32[2,3,256], index: 1, kind: input, shape index: {}]
  %s2 = inlined_call_operand.vmem [shape: f32[2,3,256], index: 2, kind: output, shape index: {}]
  %s3 = sld [smem:[#allocation0]]
  $region41: #{tpu_custom_call.1} parent=0
    _
  %s5 = ssub.s32 1, %s3
  %s6 = scalar_select 0, %s5, %s3
  %7 = sst [smem:[#allocation2]] %s0
  loop: start=0, step=1, limit=4
  $region2: #{tpu_custom_call.1} parent=0 // loop_pre_header
    _
  $region3: #{tpu_custom_call.1} parent=0 // loop_header
    %s9 = sphi 0, %s13
    %p10 = scmp.ge.s32.totalorder %s9, 4
    %s17 = sphi 0, %s17
    %s19 = sphi 0, %s17
    %s20 = sphi 0, %s19
    %s34 = sphi 0, %s20
    %s40 = sphi 0, %s42
    %s43 = sphi 0, %s40
    %s44 = sphi 0, %s43
    %s60 = sphi 0, %s44
    %s66 = sphi 0, %s68
    %s69 = sphi 0, %s66
    %s70 = sphi 0, %s69
    %s86 = sphi 0, %s70
  $region4: #{tpu_custom_call.1} parent=0 // loop_header_branch
    %12 = sbr.rel (%p10) target = $region8
  $region5: #{tpu_custom_call.1} parent=0 // loop_body
    %s14 = ssub.s32 %s9, 1
    %s15 = ssub.s32 %s9, 2
    %s16 = sadd.s32 %s9, 1
    %s18 = sadd.s32 %s17, 1
    %p21 = scmp.eq.s32.totalorder %s9, 1
    %p22 = scmp.ne.s32.totalorder %s17, %s19
    %p23 = scmp.eq.s32.totalorder %s9, 0
    %p24 = por %p22, %p23
    %p25 = scmp.ne.s32.totalorder %s17, %s19
    %p26 = scmp.eq.s32.totalorder %s14, 1
    %p27 = por %p25, %p26
    %p28 = scmp.ne.s32.totalorder %s19, %s20
    %p29 = scmp.eq.s32.totalorder %s14, 0
    %p30 = por %p28, %p29
    %p31 = scmp.ne.s32.totalorder %s19, %s20
    %p32 = scmp.eq.s32.totalorder %s15, 1
    %p33 = por %p31, %p32
    %p35 = scmp.ne.s32.totalorder %s20, %s34
    %p36 = scmp.eq.s32.totalorder %s15, 0
    %p37 = por %p35, %p36
    %s38 = ssub.s32 %s9, %s16
    %p39 = scmp.eq.s32.totalorder %s38, 0
    %s41 = sadd.s32 %s40, 1
    %s42 = scalar_select %p39, %s40, %s41
    %p45 = pneg %p39
    %p46 = scmp.eq.s32.totalorder %s9, 1
    %p47 = por %p45, %p46
    %p48 = scmp.ne.s32.totalorder %s40, %s43
    %p49 = scmp.eq.s32.totalorder %s9, 0
    %p50 = por %p48, %p49
    %p51 = scmp.ne.s32.totalorder %s40, %s43
    %p52 = scmp.eq.s32.totalorder %s14, 1
    %p53 = por %p51, %p52
    %p54 = scmp.ne.s32.totalorder %s43, %s44
    %p55 = scmp.eq.s32.totalorder %s14, 0
    %p56 = por %p54, %p55
    %p57 = scmp.ne.s32.totalorder %s43, %s44
    %p58 = scmp.eq.s32.totalorder %s15, 1
    %p59 = por %p57, %p58
    %p61 = scmp.ne.s32.totalorder %s44, %s60
    %p62 = scmp.eq.s32.totalorder %s15, 0
    %p63 = por %p61, %p62
    %s64 = ssub.s32 %s9, %s16
    %p65 = scmp.eq.s32.totalorder %s64, 0
    %s67 = sadd.s32 %s66, 1
    %s68 = scalar_select %p65, %s66, %s67
    %p71 = pneg %p65
    %p72 = scmp.eq.s32.totalorder %s9, 1
    %p73 = por %p71, %p72
    %p74 = scmp.ne.s32.totalorder %s66, %s69
    %p75 = scmp.eq.s32.totalorder %s9, 0
    %p76 = por %p74, %p75
    %p77 = scmp.ne.s32.totalorder %s66, %s69
    %p78 = scmp.eq.s32.totalorder %s14, 1
    %p79 = por %p77, %p78
    %p80 = scmp.ne.s32.totalorder %s69, %s70
    %p81 = scmp.eq.s32.totalorder %s14, 0
    %p82 = por %p80, %p81
    %p83 = scmp.ne.s32.totalorder %s69, %s70
    %p84 = scmp.eq.s32.totalorder %s15, 1
    %p85 = por %p83, %p84
    %p87 = scmp.ne.s32.totalorder %s70, %s86
    %p88 = scmp.eq.s32.totalorder %s15, 0
    %p89 = por %p87, %p88
    %p90 = scmp.le.s32.totalorder 1, %s9
    %p91 = scmp.lt.s32.totalorder %s9, 3
    %p92 = pnand %p90, %p91
    %p93 = pneg %p92
    // Predicated region
    $region9: #{tpu_custom_call.1} parent=5 // pred_check
      _
    $region10: #{tpu_custom_call.1} parent=5 // pred_check_branch
      %95 = sbr.rel (%p92) target = $region12
    $region11: #{tpu_custom_call.1} parent=5 // pred_region
      %s96 = ssub.s32 %s9, 1
      // Predicated region
      $region13: #{tpu_custom_call.1} parent=11 // pred_check
        %p97 = pneg %p30
      $region14: #{tpu_custom_call.1} parent=11 // pred_check_branch
        %99 = sbr.rel (%p97) target = $region16
      $region15: #{tpu_custom_call.1} parent=11 // pred_region
        _
      $region16: #{tpu_custom_call.1} parent=11 // pred_fallthru
        _
    $region12: #{tpu_custom_call.1} parent=5 // pred_fallthru
      _
    %p100 = scmp.lt.s32.totalorder %s9, 2
    // Predicated region
    $region17: #{tpu_custom_call.1} parent=5 // pred_check
      %p101 = pneg %p100
    $region18: #{tpu_custom_call.1} parent=5 // pred_check_branch
      %103 = sbr.rel (%p101) target = $region20
    $region19: #{tpu_custom_call.1} parent=5 // pred_region
      // Predicated region
      $region21: #{tpu_custom_call.1} parent=19 // pred_check
        %p104 = pneg %p50
      $region22: #{tpu_custom_call.1} parent=19 // pred_check_branch
        %106 = sbr.rel (%p104) target = $region24
      $region23: #{tpu_custom_call.1} parent=19 // pred_region
        %p107 = scmp.lt.s32.totalorder %s9, 1
        %s108 = scalar_select %p107, %s9, 1
        %s109 = smul.addr %s108, 2
        %s110 = smul.addr %s109, 4
        %s111 = scalar_lea.vmem %s1, %s110
      $region24: #{tpu_custom_call.1} parent=19 // pred_fallthru
        _
    $region20: #{tpu_custom_call.1} parent=5 // pred_fallthru
      _
    %p112 = scmp.le.s32.totalorder 1, %s9
    %p113 = scmp.lt.s32.totalorder %s9, 3
    %p114 = pnand %p112, %p113
    %p115 = pneg %p114
    // Predicated region
    $region25: #{tpu_custom_call.1} parent=5 // pred_check
      _
    $region26: #{tpu_custom_call.1} parent=5 // pred_check_branch
      %117 = sbr.rel (%p114) target = $region28
    $region27: #{tpu_custom_call.1} parent=5 // pred_region
      %s118 = ssub.s32 %s9, 1
      %p119 = pneg %p30
      %p120 = pneg %p27
      %p121 = scmp.lt.s32.totalorder %s14, 1
      %s122 = scalar_select %p121, %s14, 1
      %s123 = smul.addr %s122, 2
      %s124 = smul.addr %s123, 4
      %s125 = scalar_lea.vmem %s1, %s124
      %p126 = pneg %p56
      %p127 = pneg %p53
      %p128 = pneg %p82
      %p129 = pneg %p79
      %p130 = scmp.lt.s32.totalorder %s14, 1
      %s131 = scalar_select %p130, %s14, 1
      %s132 = smul.addr %s131, 2
      %s133 = smul.addr %s132, 4
      %s134 = scalar_lea.vmem %s2, %s133
      %p135 = scmp.lt.s32.totalorder %s14, 1
      %s136 = scalar_select %p135, %s14, 1
      %s137 = smul.addr %s136, 2
      %s138 = smul.addr %s137, 4
      %s139 = scalar_lea.vmem %s1, %s138
      %p140 = scmp.lt.s32.totalorder %s14, 1
      %s141 = scalar_select %p140, %s14, 1
      %s142 = smul.addr %s141, 2
      %s143 = smul.addr %s142, 4
      %s144 = scalar_lea.vmem %s2, %s143
      %s145 = sld [smem:[#allocation2]]
      %v146 = vld [vmem:[%s139] sm:$0x77]
      %148 = vst [vmem:[#allocation1] ss:$2 sm:$0xff] %v146
      %v149 = vld.sshfl [vmem:[#allocation1] sm:$0xff pattern:$0x75316420]
      %v150 = vld.sshfl [vmem:[#allocation1 + $0x8] sm:$0xff pattern:$0x75316420]
      %vm153 = vcmask 1042432
      %v154 = vsel %vm153, %v149, 0.0
      %v155 = vsel %vm153, %v150, 0.0
      %v156 = vadd.f32 %v154, %v155
      %157 = vadd.xlane.f32.xlu0 %v156
      %v158 = vpop.xlane.xlu0 %157
      %v159 = vmul.f32 %v158, 0.2989
      %v160 = vmul.f32 %v158, 0.587
      %v162 = vrot.slane %v160, 1
      %v164 = vadd.f32 %v159, %v162
      %v165 = vmul.f32 %v158, 0.114
      %v167 = vrot.slane %v165, 2
      %v169 = vadd.f32 %v164, %v167
      %v170 = vmul.f32 %v169, 0.00390625
      %v171 = vstv %s145
      %v172 = vmul.f32 %v171, %v146
      %s173 = ssub.f32 1.0, %s145
      %v174 = vstv %s173
      %v175 = vmul.f32 %v174, %v170
      %s177 = vtos %v175
      %v178 = vstv %s177
      %v180 = vadd.f32 %v172, %v178
      %v181 = vmax.f32 %v180, 0.0
      %v182 = vmin.f32 %v181, 1.0
      %183 = vst [vmem:[%s144] sm:$0x77] %v182
      %p184 = scmp.lt.s32.totalorder %s14, 1
      %s185 = scalar_select %p184, %s14, 1
      %s186 = smul.addr %s185, 2
      %s187 = smul.addr %s186, 4
      %s188 = scalar_lea.vmem %s2, %s187
      // Predicated region
      $region29: #{tpu_custom_call.1} parent=27 // pred_check
        %p189 = pneg %p79
      $region30: #{tpu_custom_call.1} parent=27 // pred_check_branch
        %191 = sbr.rel (%p189) target = $region32
      $region31: #{tpu_custom_call.1} parent=27 // pred_region
        _
      $region32: #{tpu_custom_call.1} parent=27 // pred_fallthru
        _
    $region28: #{tpu_custom_call.1} parent=5 // pred_fallthru
      _
    %p192 = scmp.le.s32.totalorder 2, %s9
    // Predicated region
    $region33: #{tpu_custom_call.1} parent=5 // pred_check
      %p193 = pneg %p192
    $region34: #{tpu_custom_call.1} parent=5 // pred_check_branch
      %195 = sbr.rel (%p193) target = $region36
    $region35: #{tpu_custom_call.1} parent=5 // pred_region
      %s196 = ssub.s32 %s9, 2
      // Predicated region
      $region37: #{tpu_custom_call.1} parent=35 // pred_check
        %p197 = pneg %p85
      $region38: #{tpu_custom_call.1} parent=35 // pred_check_branch
        %199 = sbr.rel (%p197) target = $region40
      $region39: #{tpu_custom_call.1} parent=35 // pred_region
        %p200 = scmp.lt.s32.totalorder %s15, 1
        %s201 = scalar_select %p200, %s15, 1
        %s202 = smul.addr %s201, 2
        %s203 = smul.addr %s202, 4
        %s204 = scalar_lea.vmem %s2, %s203
      $region40: #{tpu_custom_call.1} parent=35 // pred_fallthru
        _
    $region36: #{tpu_custom_call.1} parent=5 // pred_fallthru
      _
  $region6: #{tpu_custom_call.1} parent=0 // loop_footer
    %s13 = sadd.s32 1, %s9
  $region7: #{tpu_custom_call.1} parent=0 // loop_footer_branch
    %8 = sbr.rel target = $region3
  $region8: #{tpu_custom_call.1} parent=0 // loop_exit
    _

</llo_original>
